<compile_context>
chip_gen: v5e
topology: v5e:2x2
jax: 0.10.0
libtpu: 0.0.40
codegen_flags: <defaults>
</compile_context>

<pallas_src>
import math
import functools

import jax
import jax.numpy as jnp
from jax import lax
from jax.experimental import pallas as pl
from jax.experimental.pallas import tpu as pltpu


def _round_up(x, m):
    return ((x + m - 1) // m) * m


def _pick_tn(D, tn_max):
    """Descriptor tile: multiple of 128 that divides round_up(D, 128).

    This keeps output stores lane-dense while avoiding a full padded HBM copy
    of W_decoder (padding is limited to the unavoidable 128-lane alignment).
    """
    d128 = _round_up(D, 128)
    tn_max = max(128, min((tn_max // 128) * 128, d128))
    for cand in range(tn_max, 127, -128):
        if d128 % cand == 0:
            return cand, d128
    return 128, d128  # unreachable: 128 always divides d128


def _lm_head_kernel(x_ref, w1_ref, b1_ref, g_ref, beta_ref, w2_ref, b2_ref,
                    out_ref, h_ref, *, eps):
    # x_ref:    (tm, H)   activation row tile (native dtype)
    # w1_ref:   (H, H)    dense weight        (grid-invariant)
    # b1_ref:   (1, H)    dense bias          (grid-invariant)
    # g_ref:    (1, H)    LayerNorm gamma     (grid-invariant)
    # beta_ref: (1, H)    LayerNorm beta      (grid-invariant)
    # w2_ref:   (H, tn)   decoder weight tile for descriptor tile j
    # b2_ref:   (1, tn)   decoder bias tile
    # out_ref:  (tm, tn)  logits tile
    # h_ref:    (tm, H)   scratch in decoder compute dtype, reused across j
    j = pl.program_id(1)

    # dense -> GELU -> LayerNorm does not depend on the descriptor tile:
    # compute once per row tile (j == 0), cache in VMEM, reuse for every j.
    @pl.when(j == 0)
    def _():
        h = jnp.dot(x_ref[...], w1_ref[...],
                    preferred_element_type=jnp.float32)
        h = h + b1_ref[...].astype(jnp.float32)

        # exact (erf) GELU, matching PyTorch/HF BERT "gelu".
        h = 0.5 * h * (1.0 + lax.erf(h * (1.0 / math.sqrt(2.0))))

        # Single-pass LayerNorm stats; clamp variance against cancellation.
        inv_h = jnp.float32(1.0 / h.shape[-1])
        s1 = jnp.sum(h, axis=-1, keepdims=True) * inv_h
        s2 = jnp.sum(h * h, axis=-1, keepdims=True) * inv_h
        var = jnp.maximum(s2 - s1 * s1, 0.0)
        h = (h - s1) * lax.rsqrt(var + eps)
        h = h * g_ref[...].astype(jnp.float32) + beta_ref[...].astype(jnp.float32)

        # Store once in the decoder compute dtype (bf16 fast path if weights
        # are bf16) -- no per-j cast, half the scratch VMEM / vld bytes.
        h_ref[...] = h.astype(h_ref.dtype)

    out = jnp.dot(h_ref[...], w2_ref[...], preferred_element_type=jnp.float32)
    out = out + b2_ref[...].astype(jnp.float32)
    out_ref[...] = out.astype(out_ref.dtype)


def _make_call(kernel, out_shape, grid, tm, tn, H, h_dtype,
               single_buffer_invariants, cost, vmem_limit_bytes):
    inv_kwargs = {}
    if single_buffer_invariants:
        # Grid-invariant operands never change block index -> no need for a
        # second VMEM copy from default double-buffering.
        inv_kwargs = dict(pipeline_mode=pl.Buffered(1))

    in_specs = [
        pl.BlockSpec((tm, H), lambda i, j: (i, 0)),                  # x rows
        pl.BlockSpec((H, H), lambda i, j: (0, 0), **inv_kwargs),     # W_dense
        pl.BlockSpec((1, H), lambda i, j: (0, 0), **inv_kwargs),     # b_dense
        pl.BlockSpec((1, H), lambda i, j: (0, 0), **inv_kwargs),     # gamma
        pl.BlockSpec((1, H), lambda i, j: (0, 0), **inv_kwargs),     # beta
        pl.BlockSpec((H, tn), lambda i, j: (0, j)),                  # W_dec tile
        pl.BlockSpec((1, tn), lambda i, j: (0, j)),                  # bias tile
    ]
    return pl.pallas_call(
        kernel,
        out_shape=out_shape,
        grid_spec=pltpu.PrefetchScalarGridSpec(
            num_scalar_prefetch=0,
            grid=grid,
            in_specs=in_specs,
            out_specs=pl.BlockSpec((tm, tn), lambda i, j: (i, j)),
            scratch_shapes=[pltpu.VMEM((tm, H), h_dtype)],
        ),
        compiler_params=pltpu.CompilerParams(
            dimension_semantics=("parallel", "arbitrary"),
            vmem_limit_bytes=int(vmem_limit_bytes)),
        cost_estimate=cost,
    )


def lm_prediction_head(x, w_dense, b_dense, ln_gamma, ln_beta, w_decoder,
                       b_decoder, *, eps=1e-12, tm=512, tn=1024,
                       out_dtype=None, vmem_budget_bytes=48 * 2**20):
    """x: [B, S, H] -> [B, S, D] logits.

    Weights stored pre-transposed to (in_features, out_features).
    out_dtype defaults to x.dtype (use bf16 activations for vocab-scale D to
    halve the dominant logits-write HBM traffic).
    """
    B, S, H = x.shape
    D = w_decoder.shape[1]
    rows = B * S
    if out_dtype is None:
        out_dtype = x.dtype

    h_dtype = w_decoder.dtype                     # decoder MXU compute dtype
    x_b = jnp.dtype(x.dtype).itemsize
    w1_b = jnp.dtype(w_dense.dtype).itemsize
    w2_b = jnp.dtype(w_decoder.dtype).itemsize
    o_b = jnp.dtype(out_dtype).itemsize
    h_b = jnp.dtype(h_dtype).itemsize

    # --- tile selection under a v7x-safe VMEM budget ---------------------
    rows8 = _round_up(max(rows, 1), 8)
    tn, d_p = _pick_tn(D, tn)
    tm = min(_round_up(max(tm, 8), 8), rows8)

    def footprint(tm_, tn_):
        # Conservative (counts invariants double-buffered).
        return (2 * tm_ * H * x_b
                + 2 * (H * H + 3 * H) * w1_b
                + 2 * (H * tn_ + tn_) * w2_b
                + 2 * tm_ * tn_ * o_b
                + tm_ * H * h_b)

    while footprint(tm, tn) > vmem_budget_bytes and tm > 128:
        tm = max(128, _round_up(tm // 2, 8))
    while footprint(tm, tn) > vmem_budget_bytes and tn > 256:
        tn_new, d_p_new = _pick_tn(D, tn // 2)
        if tn_new >= tn:
            break
        tn, d_p = tn_new, d_p_new

    rows_p = _round_up(rows, tm)

    # --- operand prep (only the unavoidable 128-lane pad of W_decoder) ---
    x2 = x.reshape(rows, H)
    if rows_p != rows:
        x2 = jnp.pad(x2, ((0, rows_p - rows), (0, 0)))

    w2 = w_decoder
    b2 = b_decoder
    if d_p != D:
        w2 = jnp.pad(w2, ((0, 0), (0, d_p - D)))
        b2 = jnp.pad(b2, ((0, d_p - D),))

    b1 = b_dense.reshape(1, H)
    g = ln_gamma.reshape(1, H)
    beta = ln_beta.reshape(1, H)
    b2 = b2.reshape(1, d_p)

    grid = (rows_p // tm, d_p // tn)
    n_row_tiles = grid[0]
    kernel = functools.partial(_lm_head_kernel, eps=float(eps))

    # Roofline hint: W_decoder is re-streamed once per row tile; logits write
    # counted explicitly.
    bytes_accessed = int(
        rows_p * H * x_b
        + (H * H + 3 * H) * w1_b
        + n_row_tiles * (H * d_p + d_p) * w2_b
        + rows_p * d_p * o_b)
    cost = pl.CostEstimate(
        flops=int(2 * rows_p * H * H + 2 * rows_p * H * d_p),
        transcendentals=int(rows_p * H),
        bytes_accessed=bytes_accessed)

    vmem_limit = min(100 * 2**20, max(footprint(tm, tn) + 16 * 2**20,
                                      32 * 2**20))
    out_shape = jax.ShapeDtypeStruct((rows_p, d_p), out_dtype)
    args = (x2, w_dense, b1, g, beta, w2, b2)

    try:
        out = _make_call(kernel, out_shape, grid, tm, tn, H, h_dtype,
                         True, cost, vmem_limit)(*args)
    except Exception:
        # Fallback if single-buffering of invariant operands is unsupported.
        out = _make_call(kernel, out_shape, grid, tm, tn, H, h_dtype,
                         False, cost, vmem_limit)(*args)

    return out[:rows, :D].reshape(B, S, D)


def _reference(x, w_dense, b_dense, ln_gamma, ln_beta, w_decoder, b_decoder,
               eps=1e-12):
    x = x.astype(jnp.float32)
    h = jnp.einsum("bsh,hk->bsk", x, w_dense.astype(jnp.float32))
    h = h + b_dense.astype(jnp.float32)
    h = 0.5 * h * (1.0 + lax.erf(h / jnp.sqrt(2.0)))
    mean = jnp.mean(h, axis=-1, keepdims=True)
    var = jnp.mean(jnp.square(h - mean), axis=-1, keepdims=True)
    h = (h - mean) / jnp.sqrt(var + eps)
    h = h * ln_gamma.astype(jnp.float32) + ln_beta.astype(jnp.float32)
    return (jnp.einsum("bsh,hd->bsd", h, w_decoder.astype(jnp.float32))
            + b_decoder.astype(jnp.float32))


if __name__ == "__main__":
    key = jax.random.PRNGKey(0)
    B, S, H = 2, 8, 32   # batch, seq, hidden_size

    k_x, k_w1, k_b1, k_g, k_beta, k_w2, k_w2b = jax.random.split(key, 7)
    x = jax.random.normal(k_x, (B, S, H), dtype=jnp.float32)
    w_dense = jax.random.normal(k_w1, (H, H), dtype=jnp.float32) * 0.05
    b_dense = jax.random.normal(k_b1, (H,), dtype=jnp.float32) * 0.02
    ln_gamma = 1.0 + 0.1 * jax.random.normal(k_g, (H,), dtype=jnp.float32)
    ln_beta = 0.1 * jax.random.normal(k_beta, (H,), dtype=jnp.float32)

    # ---- test 1: module-sized toy config (D = 16 descriptors) ----
    D = 16
    w_decoder = jax.random.normal(k_w2, (H, D), dtype=jnp.float32) * 0.05
    b_decoder = jnp.zeros((D,), dtype=jnp.float32)   # self.bias = zeros

    out = jax.block_until_ready(
        lm_prediction_head(x, w_dense, b_dense, ln_gamma, ln_beta,
                           w_decoder, b_decoder))
    ref = _reference(x, w_dense, b_dense, ln_gamma, ln_beta, w_decoder,
                     b_decoder)
    assert out.shape == (B, S, D)
    assert jnp.allclose(out, ref, atol=1e-4, rtol=1e-4), "mismatch (test 1)"

    # ---- test 2: exercise row/descriptor tiling + hidden-scratch reuse ----
    D2 = 200
    w_decoder2 = jax.random.normal(k_w2b, (H, D2), dtype=jnp.float32) * 0.05
    b_decoder2 = 0.01 * jnp.arange(D2, dtype=jnp.float32)
    out2 = jax.block_until_ready(
        lm_prediction_head(x, w_dense, b_dense, ln_gamma, ln_beta,
                           w_decoder2, b_decoder2, tm=8, tn=128))
    ref2 = _reference(x, w_dense, b_dense, ln_gamma, ln_beta, w_decoder2,
                      b_decoder2)
    assert out2.shape == (B, S, D2)
    assert jnp.allclose(out2, ref2, atol=1e-4, rtol=1e-4), "mismatch (test 2)"

    # ---- test 3: bf16 activations/weights (bf16 MXU path, bf16 h-scratch) ----
    D3 = 384
    xb = x.astype(jnp.bfloat16)
    w_decoder3 = (jax.random.normal(k_w2b, (H, D3), dtype=jnp.float32)
                  * 0.05).astype(jnp.bfloat16)
    b_decoder3 = jnp.zeros((D3,), dtype=jnp.bfloat16)
    out3 = jax.block_until_ready(
        lm_prediction_head(xb, w_dense.astype(jnp.bfloat16),
                           b_dense.astype(jnp.bfloat16),
                           ln_gamma.astype(jnp.bfloat16),
                           ln_beta.astype(jnp.bfloat16),
                           w_decoder3, b_decoder3,
                           out_dtype=jnp.float32))
    ref3 = _reference(xb, w_dense.astype(jnp.bfloat16),
                      b_dense.astype(jnp.bfloat16),
                      ln_gamma.astype(jnp.bfloat16),
                      ln_beta.astype(jnp.bfloat16),
                      w_decoder3, b_decoder3)
    assert out3.shape == (B, S, D3)
    assert jnp.allclose(out3.astype(jnp.float32), ref3,
                        atol=5e-2, rtol=5e-2), "mismatch (test 3)"

    print("KERNEL_OK")
</pallas_src>

<mosaic_0001>
module attributes {stable_mosaic.version = 11 : i64} {
  func.func @_lm_head_kernel(%arg0: i32, %arg1: i32, %arg2: memref<16x32xf32, #tpu.memory_space<vmem>>, %arg3: memref<32x32xf32, #tpu.memory_space<vmem>>, %arg4: memref<1x32xf32, #tpu.memory_space<vmem>>, %arg5: memref<1x32xf32, #tpu.memory_space<vmem>>, %arg6: memref<1x32xf32, #tpu.memory_space<vmem>>, %arg7: memref<32x128xf32, #tpu.memory_space<vmem>>, %arg8: memref<1x128xf32, #tpu.memory_space<vmem>>, %arg9: memref<16x128xf32, #tpu.memory_space<vmem>>, %arg10: memref<16x32xf32, #tpu.memory_space<vmem>>) attributes {dimension_semantics = [#tpu.dimension_semantics<parallel>, #tpu.dimension_semantics<arbitrary>], iteration_bounds = array<i64: 1, 1>, scalar_prefetch = 0 : i64, scratch_operands = 1 : i64, tpu.core_type = #tpu.core_type<tc>, window_params = [{transform_indices = @transform_0, window_bounds = array<i64: 16, 32>}, {pipeline_mode = #tpu.pipeline_mode<synchronous>, transform_indices = @transform_1, window_bounds = array<i64: 32, 32>}, {pipeline_mode = #tpu.pipeline_mode<synchronous>, transform_indices = @transform_2, window_bounds = array<i64: 1, 32>}, {pipeline_mode = #tpu.pipeline_mode<synchronous>, transform_indices = @transform_3, window_bounds = array<i64: 1, 32>}, {pipeline_mode = #tpu.pipeline_mode<synchronous>, transform_indices = @transform_4, window_bounds = array<i64: 1, 32>}, {transform_indices = @transform_5, window_bounds = array<i64: 32, 128>}, {transform_indices = @transform_6, window_bounds = array<i64: 1, 128>}, {transform_indices = @transform_7, window_bounds = array<i64: 16, 128>}]} {
    %c0_i32 = arith.constant 0 : i32
    %0 = arith.cmpi eq, %arg1, %c0_i32 : i32
    %1 = arith.extui %0 : i1 to i32
    %c0_i32_0 = arith.constant 0 : i32
    %2 = arith.cmpi ne, %1, %c0_i32_0 : i32
    scf.if %2 {
      %c0_8 = arith.constant 0 : index
      %c0_9 = arith.constant 0 : index
      %10 = vector.load %arg2[%c0_8, %c0_9] : memref<16x32xf32, #tpu.memory_space<vmem>>, vector<16x32xf32>
      %c0_10 = arith.constant 0 : index
      %c0_11 = arith.constant 0 : index
      %11 = vector.load %arg3[%c0_10, %c0_11] : memref<32x32xf32, #tpu.memory_space<vmem>>, vector<32x32xf32>
      %cst_12 = arith.constant dense<0.000000e+00> : vector<16x32xf32>
      %12 = tpu.matmul %10, %11, %cst_12 {dimension_numbers = #tpu.dot_dimension_numbers<[1], [0], [0], [1], [0, 0, 1, 1], [], []>} : vector<16x32xf32>, vector<32x32xf32>, vector<16x32xf32> -> vector<16x32xf32>
      %c0_13 = arith.constant 0 : index
      %c0_14 = arith.constant 0 : index
      %13 = vector.load %arg4[%c0_13, %c0_14] : memref<1x32xf32, #tpu.memory_space<vmem>>, vector<1x32xf32>
      %14 = vector.broadcast %13 : vector<1x32xf32> to vector<16x32xf32>
      %15 = arith.addf %12, %14 : vector<16x32xf32>
      %cst_15 = arith.constant 5.000000e-01 : f32
      %16 = vector.broadcast %cst_15 : f32 to vector<16x32xf32>
      %17 = arith.mulf %16, %15 : vector<16x32xf32>
      %cst_16 = arith.constant 0.707106769 : f32
      %18 = vector.broadcast %cst_16 : f32 to vector<16x32xf32>
      %19 = arith.mulf %15, %18 : vector<16x32xf32>
      %20 = math.erf %19 : vector<16x32xf32>
      %cst_17 = arith.constant 1.000000e+00 : f32
      %21 = vector.broadcast %cst_17 : f32 to vector<16x32xf32>
      %22 = arith.addf %21, %20 : vector<16x32xf32>
      %23 = arith.mulf %17, %22 : vector<16x32xf32>
      %cst_18 = arith.constant dense<0.000000e+00> : vector<16xf32>
      %24 = vector.multi_reduction <add>, %23, %cst_18 [1] : vector<16x32xf32> to vector<16xf32>
      %25 = vector.shape_cast %24 : vector<16xf32> to vector<16x1xf32>
      %cst_19 = arith.constant 3.125000e-02 : f32
      %26 = vector.broadcast %cst_19 : f32 to vector<16x1xf32>
      %27 = arith.mulf %25, %26 : vector<16x1xf32>
      %28 = arith.mulf %23, %23 : vector<16x32xf32>
      %cst_20 = arith.constant dense<0.000000e+00> : vector<16xf32>
      %29 = vector.multi_reduction <add>, %28, %cst_20 [1] : vector<16x32xf32> to vector<16xf32>
      %30 = vector.shape_cast %29 : vector<16xf32> to vector<16x1xf32>
      %cst_21 = arith.constant 3.125000e-02 : f32
      %31 = vector.broadcast %cst_21 : f32 to vector<16x1xf32>
      %32 = arith.mulf %30, %31 : vector<16x1xf32>
      %33 = arith.mulf %27, %27 : vector<16x1xf32>
      %34 = arith.subf %32, %33 : vector<16x1xf32>
      %cst_22 = arith.constant 0.000000e+00 : f32
      %35 = vector.broadcast %cst_22 : f32 to vector<16x1xf32>
      %36 = arith.maximumf %34, %35 : vector<16x1xf32>
      %37 = vector.broadcast %27 : vector<16x1xf32> to vector<16x32xf32>
      %38 = arith.subf %23, %37 : vector<16x32xf32>
      %cst_23 = arith.constant 9.99999996E-13 : f32
      %39 = vector.broadcast %cst_23 : f32 to vector<16x1xf32>
      %40 = arith.addf %36, %39 : vector<16x1xf32>
      %41 = math.rsqrt %40 : vector<16x1xf32>
      %42 = vector.broadcast %41 : vector<16x1xf32> to vector<16x32xf32>
      %43 = arith.mulf %38, %42 : vector<16x32xf32>
      %c0_24 = arith.constant 0 : index
      %c0_25 = arith.constant 0 : index
      %44 = vector.load %arg5[%c0_24, %c0_25] : memref<1x32xf32, #tpu.memory_space<vmem>>, vector<1x32xf32>
      %45 = vector.broadcast %44 : vector<1x32xf32> to vector<16x32xf32>
      %46 = arith.mulf %43, %45 : vector<16x32xf32>
      %c0_26 = arith.constant 0 : index
      %c0_27 = arith.constant 0 : index
      %47 = vector.load %arg6[%c0_26, %c0_27] : memref<1x32xf32, #tpu.memory_space<vmem>>, vector<1x32xf32>
      %48 = vector.broadcast %47 : vector<1x32xf32> to vector<16x32xf32>
      %49 = arith.addf %46, %48 : vector<16x32xf32>
      %c0_28 = arith.constant 0 : index
      %c0_29 = arith.constant 0 : index
      %50 = vector.load %arg10[%c0_28, %c0_29] : memref<16x32xf32, #tpu.memory_space<vmem>>, vector<16x32xf32>
      tpu.vector_store %arg10[%c0_28, %c0_29], %49 {strides = array<i32>} : memref<16x32xf32, #tpu.memory_space<vmem>>, vector<16x32xf32>,
    } else {
    }
    %c0 = arith.constant 0 : index
    %c0_1 = arith.constant 0 : index
    %3 = vector.load %arg10[%c0, %c0_1] : memref<16x32xf32, #tpu.memory_space<vmem>>, vector<16x32xf32>
    %c0_2 = arith.constant 0 : index
    %c0_3 = arith.constant 0 : index
    %4 = vector.load %arg7[%c0_2, %c0_3] : memref<32x128xf32, #tpu.memory_space<vmem>>, vector<32x128xf32>
    %cst = arith.constant dense<0.000000e+00> : vector<16x128xf32>
    %5 = tpu.matmul %3, %4, %cst {dimension_numbers = #tpu.dot_dimension_numbers<[1], [0], [0], [1], [0, 0, 1, 1], [], []>} : vector<16x32xf32>, vector<32x128xf32>, vector<16x128xf32> -> vector<16x128xf32>
    %c0_4 = arith.constant 0 : index
    %c0_5 = arith.constant 0 : index
    %6 = vector.load %arg8[%c0_4, %c0_5] : memref<1x128xf32, #tpu.memory_space<vmem>>, vector<1x128xf32>
    %7 = vector.broadcast %6 : vector<1x128xf32> to vector<16x128xf32>
    %8 = arith.addf %5, %7 : vector<16x128xf32>
    %c0_6 = arith.constant 0 : index
    %c0_7 = arith.constant 0 : index
    %9 = vector.load %arg9[%c0_6, %c0_7] : memref<16x128xf32, #tpu.memory_space<vmem>>, vector<16x128xf32>
    tpu.vector_store %arg9[%c0_6, %c0_7], %8 {strides = array<i32>} : memref<16x128xf32, #tpu.memory_space<vmem>>, vector<16x128xf32>,
    return
  }
  func.func @transform_0(%arg0: i32, %arg1: i32) -> (i32, i32) {
    %c0_i32 = arith.constant 0 : i32
    %c0_i32_0 = arith.constant 0 : i32
    return %arg0, %c0_i32 : i32, i32
  }
  func.func @transform_1(%arg0: i32, %arg1: i32) -> (i32, i32) {
    %c0_i32 = arith.constant 0 : i32
    %c0_i32_0 = arith.constant 0 : i32
    %c0_i32_1 = arith.constant 0 : i32
    return %c0_i32, %c0_i32_0 : i32, i32
  }
  func.func @transform_2(%arg0: i32, %arg1: i32) -> (i32, i32) {
    %c0_i32 = arith.constant 0 : i32
    %c0_i32_0 = arith.constant 0 : i32
    %c0_i32_1 = arith.constant 0 : i32
    return %c0_i32, %c0_i32_0 : i32, i32
  }
  func.func @transform_3(%arg0: i32, %arg1: i32) -> (i32, i32) {
    %c0_i32 = arith.constant 0 : i32
    %c0_i32_0 = arith.constant 0 : i32
    %c0_i32_1 = arith.constant 0 : i32
    return %c0_i32, %c0_i32_0 : i32, i32
  }
  func.func @transform_4(%arg0: i32, %arg1: i32) -> (i32, i32) {
    %c0_i32 = arith.constant 0 : i32
    %c0_i32_0 = arith.constant 0 : i32
    %c0_i32_1 = arith.constant 0 : i32
    return %c0_i32, %c0_i32_0 : i32, i32
  }
  func.func @transform_5(%arg0: i32, %arg1: i32) -> (i32, i32) {
    %c0_i32 = arith.constant 0 : i32
    %c0_i32_0 = arith.constant 0 : i32
    return %c0_i32, %arg1 : i32, i32
  }
  func.func @transform_6(%arg0: i32, %arg1: i32) -> (i32, i32) {
    %c0_i32 = arith.constant 0 : i32
    %c0_i32_0 = arith.constant 0 : i32
    return %c0_i32, %arg1 : i32, i32
  }
  func.func @transform_7(%arg0: i32, %arg1: i32) -> (i32, i32) {
    %c0_i32 = arith.constant 0 : i32
    return %arg0, %arg1 : i32, i32
  }
}

module attributes {stable_mosaic.version = 11 : i64} {
  func.func @_lm_head_kernel(%arg0: i32, %arg1: i32, %arg2: memref<16x32xf32, #tpu.memory_space<vmem>>, %arg3: memref<32x32xf32, #tpu.memory_space<vmem>>, %arg4: memref<1x32xf32, #tpu.memory_space<vmem>>, %arg5: memref<1x32xf32, #tpu.memory_space<vmem>>, %arg6: memref<1x32xf32, #tpu.memory_space<vmem>>, %arg7: memref<32x128xf32, #tpu.memory_space<vmem>>, %arg8: memref<1x128xf32, #tpu.memory_space<vmem>>, %arg9: memref<16x128xf32, #tpu.memory_space<vmem>>, %arg10: memref<16x32xf32, #tpu.memory_space<vmem>>) attributes {dimension_semantics = [#tpu.dimension_semantics<parallel>, #tpu.dimension_semantics<arbitrary>], iteration_bounds = array<i64: 1, 1>, scalar_prefetch = 0 : i64, scratch_operands = 1 : i64, tpu.core_type = #tpu.core_type<tc>, window_params = [{transform_indices = @transform_0, window_bounds = array<i64: 16, 32>}, {pipeline_mode = #tpu.pipeline_mode<synchronous>, transform_indices = @transform_1, window_bounds = array<i64: 32, 32>}, {pipeline_mode = #tpu.pipeline_mode<synchronous>, transform_indices = @transform_2, window_bounds = array<i64: 1, 32>}, {pipeline_mode = #tpu.pipeline_mode<synchronous>, transform_indices = @transform_3, window_bounds = array<i64: 1, 32>}, {pipeline_mode = #tpu.pipeline_mode<synchronous>, transform_indices = @transform_4, window_bounds = array<i64: 1, 32>}, {transform_indices = @transform_5, window_bounds = array<i64: 32, 128>}, {transform_indices = @transform_6, window_bounds = array<i64: 1, 128>}, {transform_indices = @transform_7, window_bounds = array<i64: 16, 128>}]} {
    %c0_i32 = arith.constant 0 : i32
    %0 = arith.cmpi eq, %arg1, %c0_i32 : i32
    %1 = arith.extui %0 : i1 to i32
    %c0_i32_0 = arith.constant 0 : i32
    %2 = arith.cmpi ne, %1, %c0_i32_0 : i32
    scf.if %2 {
      %c0_8 = arith.constant 0 : index
      %c0_9 = arith.constant 0 : index
      %10 = vector.load %arg2[%c0_8, %c0_9] : memref<16x32xf32, #tpu.memory_space<vmem>>, vector<16x32xf32>
      %c0_10 = arith.constant 0 : index
      %c0_11 = arith.constant 0 : index
      %11 = vector.load %arg3[%c0_10, %c0_11] : memref<32x32xf32, #tpu.memory_space<vmem>>, vector<32x32xf32>
      %cst_12 = arith.constant dense<0.000000e+00> : vector<16x32xf32>
      %12 = tpu.matmul %10, %11, %cst_12 {dimension_numbers = #tpu.dot_dimension_numbers<[1], [0], [0], [1], [0, 0, 1, 1], [], []>} : vector<16x32xf32>, vector<32x32xf32>, vector<16x32xf32> -> vector<16x32xf32>
      %c0_13 = arith.constant 0 : index
      %c0_14 = arith.constant 0 : index
      %13 = vector.load %arg4[%c0_13, %c0_14] : memref<1x32xf32, #tpu.memory_space<vmem>>, vector<1x32xf32>
      %14 = vector.broadcast %13 : vector<1x32xf32> to vector<16x32xf32>
      %15 = arith.addf %12, %14 : vector<16x32xf32>
      %cst_15 = arith.constant 5.000000e-01 : f32
      %16 = vector.broadcast %cst_15 : f32 to vector<16x32xf32>
      %17 = arith.mulf %16, %15 : vector<16x32xf32>
      %cst_16 = arith.constant 0.707106769 : f32
      %18 = vector.broadcast %cst_16 : f32 to vector<16x32xf32>
      %19 = arith.mulf %15, %18 : vector<16x32xf32>
      %20 = math.erf %19 : vector<16x32xf32>
      %cst_17 = arith.constant 1.000000e+00 : f32
      %21 = vector.broadcast %cst_17 : f32 to vector<16x32xf32>
      %22 = arith.addf %21, %20 : vector<16x32xf32>
      %23 = arith.mulf %17, %22 : vector<16x32xf32>
      %cst_18 = arith.constant dense<0.000000e+00> : vector<16xf32>
      %24 = vector.multi_reduction <add>, %23, %cst_18 [1] : vector<16x32xf32> to vector<16xf32>
      %25 = vector.shape_cast %24 : vector<16xf32> to vector<16x1xf32>
      %cst_19 = arith.constant 3.125000e-02 : f32
      %26 = vector.broadcast %cst_19 : f32 to vector<16x1xf32>
      %27 = arith.mulf %25, %26 : vector<16x1xf32>
      %28 = arith.mulf %23, %23 : vector<16x32xf32>
      %cst_20 = arith.constant dense<0.000000e+00> : vector<16xf32>
      %29 = vector.multi_reduction <add>, %28, %cst_20 [1] : vector<16x32xf32> to vector<16xf32>
      %30 = vector.shape_cast %29 : vector<16xf32> to vector<16x1xf32>
      %cst_21 = arith.constant 3.125000e-02 : f32
      %31 = vector.broadcast %cst_21 : f32 to vector<16x1xf32>
      %32 = arith.mulf %30, %31 : vector<16x1xf32>
      %33 = arith.mulf %27, %27 : vector<16x1xf32>
      %34 = arith.subf %32, %33 : vector<16x1xf32>
      %cst_22 = arith.constant 0.000000e+00 : f32
      %35 = vector.broadcast %cst_22 : f32 to vector<16x1xf32>
      %36 = arith.maximumf %34, %35 : vector<16x1xf32>
      %37 = vector.broadcast %27 : vector<16x1xf32> to vector<16x32xf32>
      %38 = arith.subf %23, %37 : vector<16x32xf32>
      %cst_23 = arith.constant 9.99999996E-13 : f32
      %39 = vector.broadcast %cst_23 : f32 to vector<16x1xf32>
      %40 = arith.addf %36, %39 : vector<16x1xf32>
      %41 = math.rsqrt %40 : vector<16x1xf32>
      %42 = vector.broadcast %41 : vector<16x1xf32> to vector<16x32xf32>
      %43 = arith.mulf %38, %42 : vector<16x32xf32>
      %c0_24 = arith.constant 0 : index
      %c0_25 = arith.constant 0 : index
      %44 = vector.load %arg5[%c0_24, %c0_25] : memref<1x32xf32, #tpu.memory_space<vmem>>, vector<1x32xf32>
      %45 = vector.broadcast %44 : vector<1x32xf32> to vector<16x32xf32>
      %46 = arith.mulf %43, %45 : vector<16x32xf32>
      %c0_26 = arith.constant 0 : index
      %c0_27 = arith.constant 0 : index
      %47 = vector.load %arg6[%c0_26, %c0_27] : memref<1x32xf32, #tpu.memory_space<vmem>>, vector<1x32xf32>
      %48 = vector.broadcast %47 : vector<1x32xf32> to vector<16x32xf32>
      %49 = arith.addf %46, %48 : vector<16x32xf32>
      %c0_28 = arith.constant 0 : index
      %c0_29 = arith.constant 0 : index
      %50 = vector.load %arg10[%c0_28, %c0_29] : memref<16x32xf32, #tpu.memory_space<vmem>>, vector<16x32xf32>
      tpu.vector_store %arg10[%c0_28, %c0_29], %49 {strides = array<i32>} : memref<16x32xf32, #tpu.memory_space<vmem>>, vector<16x32xf32>,
    } else {
    }
    %c0 = arith.constant 0 : index
    %c0_1 = arith.constant 0 : index
    %3 = vector.load %arg10[%c0, %c0_1] : memref<16x32xf32, #tpu.memory_space<vmem>>, vector<16x32xf32>
    %c0_2 = arith.constant 0 : index
    %c0_3 = arith.constant 0 : index
    %4 = vector.load %arg7[%c0_2, %c0_3] : memref<32x128xf32, #tpu.memory_space<vmem>>, vector<32x128xf32>
    %cst = arith.constant dense<0.000000e+00> : vector<16x128xf32>
    %5 = tpu.matmul %3, %4, %cst {dimension_numbers = #tpu.dot_dimension_numbers<[1], [0], [0], [1], [0, 0, 1, 1], [], []>} : vector<16x32xf32>, vector<32x128xf32>, vector<16x128xf32> -> vector<16x128xf32>
    %c0_4 = arith.constant 0 : index
    %c0_5 = arith.constant 0 : index
    %6 = vector.load %arg8[%c0_4, %c0_5] : memref<1x128xf32, #tpu.memory_space<vmem>>, vector<1x128xf32>
    %7 = vector.broadcast %6 : vector<1x128xf32> to vector<16x128xf32>
    %8 = arith.addf %5, %7 : vector<16x128xf32>
    %c0_6 = arith.constant 0 : index
    %c0_7 = arith.constant 0 : index
    %9 = vector.load %arg9[%c0_6, %c0_7] : memref<16x128xf32, #tpu.memory_space<vmem>>, vector<16x128xf32>
    tpu.vector_store %arg9[%c0_6, %c0_7], %8 {strides = array<i32>} : memref<16x128xf32, #tpu.memory_space<vmem>>, vector<16x128xf32>,
    return
  }
  func.func @transform_0(%arg0: i32, %arg1: i32) -> (i32, i32) {
    %c0_i32 = arith.constant 0 : i32
    %c0_i32_0 = arith.constant 0 : i32
    return %arg0, %c0_i32 : i32, i32
  }
  func.func @transform_1(%arg0: i32, %arg1: i32) -> (i32, i32) {
    %c0_i32 = arith.constant 0 : i32
    %c0_i32_0 = arith.constant 0 : i32
    %c0_i32_1 = arith.constant 0 : i32
    return %c0_i32, %c0_i32_0 : i32, i32
  }
  func.func @transform_2(%arg0: i32, %arg1: i32) -> (i32, i32) {
    %c0_i32 = arith.constant 0 : i32
    %c0_i32_0 = arith.constant 0 : i32
    %c0_i32_1 = arith.constant 0 : i32
    return %c0_i32, %c0_i32_0 : i32, i32
  }
  func.func @transform_3(%arg0: i32, %arg1: i32) -> (i32, i32) {
    %c0_i32 = arith.constant 0 : i32
    %c0_i32_0 = arith.constant 0 : i32
    %c0_i32_1 = arith.constant 0 : i32
    return %c0_i32, %c0_i32_0 : i32, i32
  }
  func.func @transform_4(%arg0: i32, %arg1: i32) -> (i32, i32) {
    %c0_i32 = arith.constant 0 : i32
    %c0_i32_0 = arith.constant 0 : i32
    %c0_i32_1 = arith.constant 0 : i32
    return %c0_i32, %c0_i32_0 : i32, i32
  }
  func.func @transform_5(%arg0: i32, %arg1: i32) -> (i32, i32) {
    %c0_i32 = arith.constant 0 : i32
    %c0_i32_0 = arith.constant 0 : i32
    return %c0_i32, %arg1 : i32, i32
  }
  func.func @transform_6(%arg0: i32, %arg1: i32) -> (i32, i32) {
    %c0_i32 = arith.constant 0 : i32
    %c0_i32_0 = arith.constant 0 : i32
    return %c0_i32, %arg1 : i32, i32
  }
  func.func @transform_7(%arg0: i32, %arg1: i32) -> (i32, i32) {
    %c0_i32 = arith.constant 0 : i32
    return %arg0, %arg1 : i32, i32
  }
}

</mosaic_0001>

<llo_original>
// kernel: tpu_custom_call.1
$region0: #{tpu_custom_call.1}
  #allocation0 [shape = 'u32[]', space=smem, size = 0x4, offset = 0x4, fixed_abs, tag = 'smem constant byte address 0x4 - core index']
  #allocation1 [shape = 'u32[72,128]{1,0:T(1,128)}', space=vmem, size = 0x9000, scoped, tag = 'internal scratch']
  #allocation2 [shape = 'f32[16,32]{1,0:T(8,128)}', space=vmem, size = 0x2000, scoped, tag = 'scratch operand']
  %s0 = inlined_call_operand.hbm [shape: f32[16,32], index: 0, kind: input, shape index: {}]
  %s1 = inlined_call_operand.hbm [shape: f32[32,32], index: 1, kind: input, shape index: {}]
  %s2 = inlined_call_operand.vmem [shape: f32[1,32], index: 2, kind: input, shape index: {}]
  %s3 = inlined_call_operand.vmem [shape: f32[1,32], index: 3, kind: input, shape index: {}]
  %s4 = inlined_call_operand.vmem [shape: f32[1,32], index: 4, kind: input, shape index: {}]
  %s5 = inlined_call_operand.hbm [shape: f32[32,128], index: 5, kind: input, shape index: {}]
  %s6 = inlined_call_operand.vmem [shape: f32[1,128], index: 6, kind: input, shape index: {}]
  %s7 = inlined_call_operand.hbm [shape: f32[16,128], index: 7, kind: output, shape index: {}]
  %s8 = sld [smem:[#allocation0]]
  $region54: #{tpu_custom_call.1} parent=0
    _
  %s10 = ssub.s32 1, %s8
  %s11 = scalar_select 0, %s10, %s8
  $region1: #{tpu_custom_call.1} parent=0
    #allocation3 [shape = 'u8[8192]{0}', space=vmem, size = 0x2000, scoped, tag = 'input window, operand 0, single buffered']
    #allocation4 [shape = 's32[1]{0}', space=sflag, size = 0x4, scoped, tag = 'scoped memory for tpu_custom_call.1']
    #allocation5 [shape = 's32[1]{0}', space=sflag, size = 0x4, scoped, tag = 'scoped memory for tpu_custom_call.1']
    #allocation6 [shape = 'u8[16384]{0}', space=vmem, size = 0x4000, scoped, tag = 'input window, operand 1, single buffered']
    #allocation7 [shape = 's32[1]{0}', space=sflag, size = 0x4, scoped, tag = 'scoped memory for tpu_custom_call.1']
    #allocation8 [shape = 'u8[16384]{0}', space=vmem, size = 0x4000, scoped, tag = 'input window, operand 5, single buffered']
    #allocation9 [shape = 'u8[8192]{0}', space=vmem, size = 0x2000, scoped, tag = 'output window, operand 0, single buffered']
    %12 = vsyncpa [#allocation4], 0
    %13 = vsyncpa [#allocation7], 0
    %14 = vsyncpa [#allocation5], 0
    // Predicated region
    $region2: #{tpu_custom_call.1} parent=1 // pred_check
      _
    $region3: #{tpu_custom_call.1} parent=1 // pred_check_branch
      %16 = sbr.rel (0) target = $region5
    $region4: #{tpu_custom_call.1} parent=1 // pred_region
      %18 = vsyncadd [#allocation4], 0
      %s19 = sshll.u32 %s0, 4
      %s20 = int_to_ptr.hbm [resolvable:$true] %s19
      %s21 = sshll.u32 [#allocation3], 4
      %s22 = int_to_ptr.vmem [resolvable:$true] %s21
      %27 = dma.hbm_to_vmem [thread:$0]  %s20, 256, %s22, [#allocation4], 128, 128, 8
    $region5: #{tpu_custom_call.1} parent=1 // pred_fallthru
      _
    // Predicated region
    $region6: #{tpu_custom_call.1} parent=1 // pred_check
      _
    $region7: #{tpu_custom_call.1} parent=1 // pred_check_branch
      %29 = sbr.rel (0) target = $region9
    $region8: #{tpu_custom_call.1} parent=1 // pred_region
      %31 = vsyncadd [#allocation7], 0
      %s32 = sshll.u32 %s1, 4
      %s33 = int_to_ptr.hbm [resolvable:$true] %s32
      %s34 = sshll.u32 [#allocation6], 4
      %s35 = int_to_ptr.vmem [resolvable:$true] %s34
      %40 = dma.hbm_to_vmem [thread:$0]  %s33, 512, %s35, [#allocation7], 128, 128, 8
    $region9: #{tpu_custom_call.1} parent=1 // pred_fallthru
      _
    // Predicated region
    $region10: #{tpu_custom_call.1} parent=1 // pred_check
      _
    $region11: #{tpu_custom_call.1} parent=1 // pred_check_branch
      %42 = sbr.rel (0) target = $region13
    $region12: #{tpu_custom_call.1} parent=1 // pred_region
      _
    $region13: #{tpu_custom_call.1} parent=1 // pred_fallthru
      _
    // Predicated region
    $region14: #{tpu_custom_call.1} parent=1 // pred_check
      _
    $region15: #{tpu_custom_call.1} parent=1 // pred_check_branch
      %44 = sbr.rel (0) target = $region17
    $region16: #{tpu_custom_call.1} parent=1 // pred_region
      _
    $region17: #{tpu_custom_call.1} parent=1 // pred_fallthru
      _
    // Predicated region
    $region18: #{tpu_custom_call.1} parent=1 // pred_check
      _
    $region19: #{tpu_custom_call.1} parent=1 // pred_check_branch
      %46 = sbr.rel (0) target = $region21
    $region20: #{tpu_custom_call.1} parent=1 // pred_region
      _
    $region21: #{tpu_custom_call.1} parent=1 // pred_fallthru
      _
    // Predicated region
    $region22: #{tpu_custom_call.1} parent=1 // pred_check
      _
    $region23: #{tpu_custom_call.1} parent=1 // pred_check_branch
      %48 = sbr.rel (0) target = $region25
    $region24: #{tpu_custom_call.1} parent=1 // pred_region
      %50 = vsyncadd [#allocation7], 0
      %s51 = sshll.u32 %s5, 4
      %s52 = int_to_ptr.hbm [resolvable:$true] %s51
      %s53 = sshll.u32 [#allocation8], 4
      %s54 = int_to_ptr.vmem [resolvable:$true] %s53
      %59 = dma.hbm_to_vmem [thread:$0]  %s52, 512, %s54, [#allocation7], 128, 128, 8
    $region25: #{tpu_custom_call.1} parent=1 // pred_fallthru
      _
    // Predicated region
    $region26: #{tpu_custom_call.1} parent=1 // pred_check
      _
    $region27: #{tpu_custom_call.1} parent=1 // pred_check_branch
      %61 = sbr.rel (0) target = $region29
    $region28: #{tpu_custom_call.1} parent=1 // pred_region
      _
    $region29: #{tpu_custom_call.1} parent=1 // pred_fallthru
      _
    // Predicated region
    $region30: #{tpu_custom_call.1} parent=1 // pred_check
      _
    $region31: #{tpu_custom_call.1} parent=1 // pred_check_branch
      %63 = sbr.rel (0) target = $region33
    $region32: #{tpu_custom_call.1} parent=1 // pred_region
      %65 = dma.done [#allocation4], 256
    $region33: #{tpu_custom_call.1} parent=1 // pred_fallthru
      _
    // Predicated region
    $region34: #{tpu_custom_call.1} parent=1 // pred_check
      _
    $region35: #{tpu_custom_call.1} parent=1 // pred_check_branch
      %67 = sbr.rel (0) target = $region37
    $region36: #{tpu_custom_call.1} parent=1 // pred_region
      %69 = dma.done [#allocation7], 512
    $region37: #{tpu_custom_call.1} parent=1 // pred_fallthru
      _
    // Predicated region
    $region38: #{tpu_custom_call.1} parent=1 // pred_check
      _
    $region39: #{tpu_custom_call.1} parent=1 // pred_check_branch
      %71 = sbr.rel (0) target = $region41
    $region40: #{tpu_custom_call.1} parent=1 // pred_region
      %73 = dma.done [#allocation7], 512
    $region41: #{tpu_custom_call.1} parent=1 // pred_fallthru
      _
    %p74 = scmp.eq.s32.totalorder 0, 0
    // Predicated region
    $region42: #{tpu_custom_call.1} parent=1 // pred_check
      %p75 = pneg %p74
    $region43: #{tpu_custom_call.1} parent=1 // pred_check_branch
      %77 = sbr.rel (%p75) target = $region45
    $region44: #{tpu_custom_call.1} parent=1 // pred_region
      %v78 = vld [vmem:[#allocation3] sm:$0xff]
      %v79 = vld [vmem:[#allocation3 + $0x8] sm:$0xff]
      %v80 = vld [vmem:[#allocation6] sm:$0xff]
      %v81 = vld [vmem:[#allocation6 + $0x8] sm:$0xff]
      %v82 = vld [vmem:[#allocation6 + $0x10] sm:$0xff]
      %v83 = vld [vmem:[#allocation6 + $0x18] sm:$0xff]
      %v84 = vld [vmem:[%s2] sm:$0x1]
      %v86 = vperm.slane %v84, 0
      %vm88 = vcmask 261120
      %v90 = vsel %vm88, %v78, 0
      %v93 = vsel %vm88, %v79, 0
      %95 = vmatpush.msra.mxu0 0.0
      %96 = vmatpush.msra.mxu0 0.0
      %97 = vmatpush.msra.mxu0 0.0
      %98 = vmatpush.msra.mxu0 0.0
      %99 = vmatpush.msra.mxu0 0.0
      %100 = vmatpush.msra.mxu0 0.0
      %101 = vmatpush.msra.mxu0 0.0
      %102 = vmatpush.msra.mxu0 0.0
      %103 = vmatpush.msra.mxu0 0.0
      %104 = vmatpush.msra.mxu0 0.0
      %105 = vmatpush.msra.mxu0 0.0
      %106 = vmatpush.msra.mxu0 0.0
      %107 = vmatpush.msra.mxu0 %v83
      %108 = vmatpush.msra.mxu0 %v82
      %109 = vmatpush.msra.mxu0 %v81
      %110 = vmatpush.msra.mxu0 %v80
      %111 = vmatmul.f32.gmra.mxu0 %v90
      %v112 = vpop.f32.mrf.mxu0
      %v113 = vadd.f32 %v86, %v112
      %114 = vmatmul.f32.gmra.mxu0 %v93
      %v115 = vpop.f32.mrf.mxu0
      %v116 = vadd.f32 %v86, %v115
      %117 = vdwg.mxu0
      %v118 = vmul.f32 %v113, 0.5
      %v119 = vmul.f32 %v116, 0.5
      %v120 = vmul.f32 %v113, 0.70710677
      %v121 = vmul.f32 %v116, 0.70710677
      %v122 = vmul.f32 %v120, %v120
      %v123 = vmin.f32 16.0, %v122
      %v124 = vmul.f32 %v123, 2.1237322e-06
      %v125 = vadd.f32 %v124, 0.00028619796
      %v126 = vmul.f32 %v123, %v125
      %v127 = vadd.f32 %v126, 0.0036580483
      %v128 = vmul.f32 %v123, %v127
      %v129 = vadd.f32 %v128, 0.05243302
      %v130 = vmul.f32 %v123, %v129
      %v131 = vadd.f32 %v130, 0.18741608
      %v132 = vmul.f32 %v123, %v131
      %v133 = vadd.f32 %v132, 1.1283791
      %v134 = vmul.f32 %v120, %v133
      %v135 = vmul.f32 %v123, 3.8918573e-05
      %v136 = vadd.f32 %v135, 0.001143296
      %v137 = vmul.f32 %v123, %v136
      %v138 = vadd.f32 %v137, 0.014752088
      %v139 = vmul.f32 %v123, %v138
      %v140 = vadd.f32 %v139, 0.112945676
      %v141 = vmul.f32 %v123, %v140
      %v142 = vadd.f32 %v141, 0.4994258
      %v143 = vmul.f32 %v123, %v142
      %v144 = vadd.f32 %v143, 1.0
      %v145 = vrcp.pop %v144
      %v146 = vmul.f32 %v144, %v145
      %v147 = vsub.f32 1.0, %v146
      %v148 = vmul.f32 %v145, %v147
      %v149 = vadd.f32 %v145, %v148
      %vm150 = vweird.f32 %v144
      %vm151 = vweird.f32 %v145
      %vm152 = vmor %vm150, %vm151
      %v153 = vsel %vm152, %v145, %v149
      %v154 = vand.u32 2147483647, %v144
      %vm155 = vcmp.eq.f32.partialorder %v154, 8.507059e+37
      %v156 = vand.u32 %v144, 2147483648
      %v157 = vor.u32 1.1754944e-38, %v156
      %v158 = vsel %vm155, %v157, %v153
      %v159 = vmul.f32 %v134, %v158
      %v160 = vmin.f32 %v159, 1.0
      %v161 = vmax.f32 %v160, -1.0
      %v162 = vmul.f32 %v121, %v121
      %v163 = vmin.f32 16.0, %v162
      %v164 = vmul.f32 %v163, 2.1237322e-06
      %v165 = vadd.f32 %v164, 0.00028619796
      %v166 = vmul.f32 %v163, %v165
      %v167 = vadd.f32 %v166, 0.0036580483
      %v168 = vmul.f32 %v163, %v167
      %v169 = vadd.f32 %v168, 0.05243302
      %v170 = vmul.f32 %v163, %v169
      %v171 = vadd.f32 %v170, 0.18741608
      %v172 = vmul.f32 %v163, %v171
      %v173 = vadd.f32 %v172, 1.1283791
      %v174 = vmul.f32 %v121, %v173
      %v175 = vmul.f32 %v163, 3.8918573e-05
      %v176 = vadd.f32 %v175, 0.001143296
      %v177 = vmul.f32 %v163, %v176
      %v178 = vadd.f32 %v177, 0.014752088
      %v179 = vmul.f32 %v163, %v178
      %v180 = vadd.f32 %v179, 0.112945676
      %v181 = vmul.f32 %v163, %v180
      %v182 = vadd.f32 %v181, 0.4994258
      %v183 = vmul.f32 %v163, %v182
      %v184 = vadd.f32 %v183, 1.0
      %v185 = vrcp.pop %v184
      %v186 = vmul.f32 %v184, %v185
      %v187 = vsub.f32 1.0, %v186
      %v188 = vmul.f32 %v185, %v187
      %v189 = vadd.f32 %v185, %v188
      %vm190 = vweird.f32 %v184
      %vm191 = vweird.f32 %v185
      %vm192 = vmor %vm190, %vm191
      %v193 = vsel %vm192, %v185, %v189
      %v194 = vand.u32 2147483647, %v184
      %vm195 = vcmp.eq.f32.partialorder %v194, 8.507059e+37
      %v196 = vand.u32 %v184, 2147483648
      %v197 = vor.u32 1.1754944e-38, %v196
      %v198 = vsel %vm195, %v197, %v193
      %v199 = vmul.f32 %v174, %v198
      %v200 = vmin.f32 %v199, 1.0
      %v201 = vmax.f32 %v200, -1.0
      %v202 = vadd.f32 %v161, 1.0
      %v203 = vadd.f32 %v201, 1.0
      %v204 = vmul.f32 %v118, %v202
      %v205 = vmul.f32 %v119, %v203
      %v206 = vsel %vm88, %v204, 0.0
      %207 = vadd.xlane.f32.xlu0 %v206
      %v208 = vpop.xlane.xlu0 %207
      %v209 = vsel %vm88, %v205, 0.0
      %210 = vadd.xlane.f32.xlu0 %v209
      %v211 = vpop.xlane.xlu0 %210
      %v212 = vmul.f32 %v208, 0.03125
      %v213 = vmul.f32 %v211, 0.03125
      %v214 = vmul.f32 %v204, %v204
      %v215 = vmul.f32 %v205, %v205
      %v216 = vsel %vm88, %v214, 0.0
      %217 = vadd.xlane.f32.xlu0 %v216
      %v218 = vpop.xlane.xlu0 %217
      %v219 = vsel %vm88, %v215, 0.0
      %220 = vadd.xlane.f32.xlu0 %v219
      %v221 = vpop.xlane.xlu0 %220
      %v222 = vmul.f32 %v218, 0.03125
      %v223 = vmul.f32 %v221, 0.03125
      %v224 = vmul.f32 %v212, %v212
      %v225 = vmul.f32 %v213, %v213
      %v226 = vsub.f32 %v222, %v224
      %v227 = vsub.f32 %v223, %v225
      %v228 = vmax.f32 %v226, 0.0
      %v229 = vmax.f32 %v227, 0.0
      %v230 = vsub.f32 %v204, %v212
      %v231 = vsub.f32 %v205, %v213
      %v232 = vadd.f32 %v228, 1e-12
      %v233 = vadd.f32 %v229, 1e-12
      %v234 = vrsqrt.pop %v232
      %v235 = vmul.f32 %v234, %v232
      %v236 = vmul.f32 %v235, %v234
      %v237 = vmul.f32 0.5, %v236
      %v238 = vsub.f32 1.5, %v237
      %v239 = vmul.f32 %v234, %v238
      %vm240 = vweird.f32 %v232
      %vm241 = vweird.f32 %v234
      %vm242 = vmor %vm240, %vm241
      %v243 = vsel %vm242, %v234, %v239
      %v244 = vrsqrt.pop %v233
      %v245 = vmul.f32 %v244, %v233
      %v246 = vmul.f32 %v245, %v244
      %v247 = vmul.f32 0.5, %v246
      %v248 = vsub.f32 1.5, %v247
      %v249 = vmul.f32 %v244, %v248
      %vm250 = vweird.f32 %v233
      %vm251 = vweird.f32 %v244
      %vm252 = vmor %vm250, %vm251
      %v253 = vsel %vm252, %v244, %v249
      %v254 = vmul.f32 %v230, %v243
      %v255 = vmul.f32 %v231, %v253
      %v256 = vld [vmem:[%s3] sm:$0x1]
      %v258 = vperm.slane %v256, 0
      %v260 = vmul.f32 %v254, %v258
      %v261 = vmul.f32 %v255, %v258
      %v262 = vld [vmem:[%s4] sm:$0x1]
      %v264 = vperm.slane %v262, 0
      %v266 = vadd.f32 %v260, %v264
      %v267 = vadd.f32 %v261, %v264
      %268 = vst.msk [vmem:[#allocation2] sm:$0xff] %vm88, %v266
      %269 = vst.msk [vmem:[#allocation2 + $0x8] sm:$0xff] %vm88, %v267
    $region45: #{tpu_custom_call.1} parent=1 // pred_fallthru
      _
    %v270 = vld [vmem:[#allocation2] sm:$0xff]
    %v271 = vld [vmem:[#allocation2 + $0x8] sm:$0xff]
    %v272 = vld [vmem:[#allocation8] sm:$0xff]
    %v273 = vld [vmem:[#allocation8 + $0x8] sm:$0xff]
    %v274 = vld [vmem:[#allocation8 + $0x10] sm:$0xff]
    %v275 = vld [vmem:[#allocation8 + $0x18] sm:$0xff]
    %v276 = vld [vmem:[%s6] sm:$0x1]
    %v278 = vperm.slane %v276, 0
    %vm280 = vcmask 261120
    %v282 = vsel %vm280, %v270, 0
    %v285 = vsel %vm280, %v271, 0
    %287 = vmatpush.msra.mxu0 0.0
    %288 = vmatpush.msra.mxu0 0.0
    %289 = vmatpush.msra.mxu0 0.0
    %290 = vmatpush.msra.mxu0 0.0
    %291 = vmatpush.msra.mxu0 0.0
    %292 = vmatpush.msra.mxu0 0.0
    %293 = vmatpush.msra.mxu0 0.0
    %294 = vmatpush.msra.mxu0 0.0
    %295 = vmatpush.msra.mxu0 0.0
    %296 = vmatpush.msra.mxu0 0.0
    %297 = vmatpush.msra.mxu0 0.0
    %298 = vmatpush.msra.mxu0 0.0
    %299 = vmatpush.msra.mxu0 %v275
    %300 = vmatpush.msra.mxu0 %v274
    %301 = vmatpush.msra.mxu0 %v273
    %302 = vmatpush.msra.mxu0 %v272
    %303 = vmatmul.f32.gmra.mxu0 %v282
    %v304 = vpop.f32.mrf.mxu0
    %v305 = vadd.f32 %v278, %v304
    %306 = vmatmul.f32.gmra.mxu0 %v285
    %v307 = vpop.f32.mrf.mxu0
    %v308 = vadd.f32 %v278, %v307
    %309 = vdwg.mxu0
    %310 = vst [vmem:[#allocation9] sm:$0xff] %v305
    %311 = vst [vmem:[#allocation9 + $0x8] sm:$0xff] %v308
    // Predicated region
    $region46: #{tpu_custom_call.1} parent=1 // pred_check
      _
    $region47: #{tpu_custom_call.1} parent=1 // pred_check_branch
      %313 = sbr.rel (0) target = $region49
    $region48: #{tpu_custom_call.1} parent=1 // pred_region
      %315 = vsyncadd [#allocation5], 0
      %s316 = sshll.u32 [#allocation9], 4
      %s317 = int_to_ptr.vmem [resolvable:$true] %s316
      %s318 = sshll.u32 %s7, 4
      %s319 = int_to_ptr.hbm [resolvable:$true] %s318
      %324 = dma.vmem_to_hbm [thread:$0]  %s317, 256, %s319, [#allocation5], 128, 128, 8
    $region49: #{tpu_custom_call.1} parent=1 // pred_fallthru
      _
    // Predicated region
    $region50: #{tpu_custom_call.1} parent=1 // pred_check
      _
    $region51: #{tpu_custom_call.1} parent=1 // pred_check_branch
      %326 = sbr.rel (0) target = $region53
    $region52: #{tpu_custom_call.1} parent=1 // pred_region
      %328 = dma.done [#allocation5], 256
    $region53: #{tpu_custom_call.1} parent=1 // pred_fallthru
      _
    %329 = vsyncpa [#allocation4], 1
    %330 = vsyncpa [#allocation7], 1
    %331 = vsyncpa [#allocation5], 1

// kernel: tpu_custom_call.1
$region0: #{tpu_custom_call.1}
  #allocation0 [shape = 'u32[]', space=smem, size = 0x4, offset = 0x4, fixed_abs, tag = 'smem constant byte address 0x4 - core index']
  #allocation1 [shape = 'u32[72,128]{1,0:T(1,128)}', space=vmem, size = 0x9000, scoped, tag = 'internal scratch']
  #allocation2 [shape = 'f32[16,32]{1,0:T(8,128)}', space=vmem, size = 0x2000, scoped, tag = 'scratch operand']
  %s0 = inlined_call_operand.hbm [shape: f32[16,32], index: 0, kind: input, shape index: {}]
  %s1 = inlined_call_operand.hbm [shape: f32[32,32], index: 1, kind: input, shape index: {}]
  %s2 = inlined_call_operand.vmem [shape: f32[1,32], index: 2, kind: input, shape index: {}]
  %s3 = inlined_call_operand.vmem [shape: f32[1,32], index: 3, kind: input, shape index: {}]
  %s4 = inlined_call_operand.vmem [shape: f32[1,32], index: 4, kind: input, shape index: {}]
  %s5 = inlined_call_operand.hbm [shape: f32[32,128], index: 5, kind: input, shape index: {}]
  %s6 = inlined_call_operand.vmem [shape: f32[1,128], index: 6, kind: input, shape index: {}]
  %s7 = inlined_call_operand.hbm [shape: f32[16,128], index: 7, kind: output, shape index: {}]
  %s8 = sld [smem:[#allocation0]]
  $region54: #{tpu_custom_call.1} parent=0
    _
  %s10 = ssub.s32 1, %s8
  %s11 = scalar_select 0, %s10, %s8
  $region1: #{tpu_custom_call.1} parent=0
    #allocation3 [shape = 'u8[8192]{0}', space=vmem, size = 0x2000, scoped, tag = 'input window, operand 0, single buffered']
    #allocation4 [shape = 's32[1]{0}', space=sflag, size = 0x4, scoped, tag = 'scoped memory for tpu_custom_call.1']
    #allocation5 [shape = 's32[1]{0}', space=sflag, size = 0x4, scoped, tag = 'scoped memory for tpu_custom_call.1']
    #allocation6 [shape = 'u8[16384]{0}', space=vmem, size = 0x4000, scoped, tag = 'input window, operand 1, single buffered']
    #allocation7 [shape = 's32[1]{0}', space=sflag, size = 0x4, scoped, tag = 'scoped memory for tpu_custom_call.1']
    #allocation8 [shape = 'u8[16384]{0}', space=vmem, size = 0x4000, scoped, tag = 'input window, operand 5, single buffered']
    #allocation9 [shape = 'u8[8192]{0}', space=vmem, size = 0x2000, scoped, tag = 'output window, operand 0, single buffered']
    %12 = vsyncpa [#allocation4], 0
    %13 = vsyncpa [#allocation7], 0
    %14 = vsyncpa [#allocation5], 0
    // Predicated region
    $region2: #{tpu_custom_call.1} parent=1 // pred_check
      _
    $region3: #{tpu_custom_call.1} parent=1 // pred_check_branch
      %16 = sbr.rel (0) target = $region5
    $region4: #{tpu_custom_call.1} parent=1 // pred_region
      %18 = vsyncadd [#allocation4], 0
      %s19 = sshll.u32 %s0, 4
      %s20 = int_to_ptr.hbm [resolvable:$true] %s19
      %s21 = sshll.u32 [#allocation3], 4
      %s22 = int_to_ptr.vmem [resolvable:$true] %s21
      %27 = dma.hbm_to_vmem [thread:$0]  %s20, 256, %s22, [#allocation4], 128, 128, 8
    $region5: #{tpu_custom_call.1} parent=1 // pred_fallthru
      _
    // Predicated region
    $region6: #{tpu_custom_call.1} parent=1 // pred_check
      _
    $region7: #{tpu_custom_call.1} parent=1 // pred_check_branch
      %29 = sbr.rel (0) target = $region9
    $region8: #{tpu_custom_call.1} parent=1 // pred_region
      %31 = vsyncadd [#allocation7], 0
      %s32 = sshll.u32 %s1, 4
      %s33 = int_to_ptr.hbm [resolvable:$true] %s32
      %s34 = sshll.u32 [#allocation6], 4
      %s35 = int_to_ptr.vmem [resolvable:$true] %s34
      %40 = dma.hbm_to_vmem [thread:$0]  %s33, 512, %s35, [#allocation7], 128, 128, 8
    $region9: #{tpu_custom_call.1} parent=1 // pred_fallthru
      _
    // Predicated region
    $region10: #{tpu_custom_call.1} parent=1 // pred_check
      _
    $region11: #{tpu_custom_call.1} parent=1 // pred_check_branch
      %42 = sbr.rel (0) target = $region13
    $region12: #{tpu_custom_call.1} parent=1 // pred_region
      _
    $region13: #{tpu_custom_call.1} parent=1 // pred_fallthru
      _
    // Predicated region
    $region14: #{tpu_custom_call.1} parent=1 // pred_check
      _
    $region15: #{tpu_custom_call.1} parent=1 // pred_check_branch
      %44 = sbr.rel (0) target = $region17
    $region16: #{tpu_custom_call.1} parent=1 // pred_region
      _
    $region17: #{tpu_custom_call.1} parent=1 // pred_fallthru
      _
    // Predicated region
    $region18: #{tpu_custom_call.1} parent=1 // pred_check
      _
    $region19: #{tpu_custom_call.1} parent=1 // pred_check_branch
      %46 = sbr.rel (0) target = $region21
    $region20: #{tpu_custom_call.1} parent=1 // pred_region
      _
    $region21: #{tpu_custom_call.1} parent=1 // pred_fallthru
      _
    // Predicated region
    $region22: #{tpu_custom_call.1} parent=1 // pred_check
      _
    $region23: #{tpu_custom_call.1} parent=1 // pred_check_branch
      %48 = sbr.rel (0) target = $region25
    $region24: #{tpu_custom_call.1} parent=1 // pred_region
      %50 = vsyncadd [#allocation7], 0
      %s51 = sshll.u32 %s5, 4
      %s52 = int_to_ptr.hbm [resolvable:$true] %s51
      %s53 = sshll.u32 [#allocation8], 4
      %s54 = int_to_ptr.vmem [resolvable:$true] %s53
      %59 = dma.hbm_to_vmem [thread:$0]  %s52, 512, %s54, [#allocation7], 128, 128, 8
    $region25: #{tpu_custom_call.1} parent=1 // pred_fallthru
      _
    // Predicated region
    $region26: #{tpu_custom_call.1} parent=1 // pred_check
      _
    $region27: #{tpu_custom_call.1} parent=1 // pred_check_branch
      %61 = sbr.rel (0) target = $region29
    $region28: #{tpu_custom_call.1} parent=1 // pred_region
      _
    $region29: #{tpu_custom_call.1} parent=1 // pred_fallthru
      _
    // Predicated region
    $region30: #{tpu_custom_call.1} parent=1 // pred_check
      _
    $region31: #{tpu_custom_call.1} parent=1 // pred_check_branch
      %63 = sbr.rel (0) target = $region33
    $region32: #{tpu_custom_call.1} parent=1 // pred_region
      %65 = dma.done [#allocation4], 256
    $region33: #{tpu_custom_call.1} parent=1 // pred_fallthru
      _
    // Predicated region
    $region34: #{tpu_custom_call.1} parent=1 // pred_check
      _
    $region35: #{tpu_custom_call.1} parent=1 // pred_check_branch
      %67 = sbr.rel (0) target = $region37
    $region36: #{tpu_custom_call.1} parent=1 // pred_region
      %69 = dma.done [#allocation7], 512
    $region37: #{tpu_custom_call.1} parent=1 // pred_fallthru
      _
    // Predicated region
    $region38: #{tpu_custom_call.1} parent=1 // pred_check
      _
    $region39: #{tpu_custom_call.1} parent=1 // pred_check_branch
      %71 = sbr.rel (0) target = $region41
    $region40: #{tpu_custom_call.1} parent=1 // pred_region
      %73 = dma.done [#allocation7], 512
    $region41: #{tpu_custom_call.1} parent=1 // pred_fallthru
      _
    %p74 = scmp.eq.s32.totalorder 0, 0
    // Predicated region
    $region42: #{tpu_custom_call.1} parent=1 // pred_check
      %p75 = pneg %p74
    $region43: #{tpu_custom_call.1} parent=1 // pred_check_branch
      %77 = sbr.rel (%p75) target = $region45
    $region44: #{tpu_custom_call.1} parent=1 // pred_region
      %v78 = vld [vmem:[#allocation3] sm:$0xff]
      %v79 = vld [vmem:[#allocation3 + $0x8] sm:$0xff]
      %v80 = vld [vmem:[#allocation6] sm:$0xff]
      %v81 = vld [vmem:[#allocation6 + $0x8] sm:$0xff]
      %v82 = vld [vmem:[#allocation6 + $0x10] sm:$0xff]
      %v83 = vld [vmem:[#allocation6 + $0x18] sm:$0xff]
      %v84 = vld [vmem:[%s2] sm:$0x1]
      %v86 = vperm.slane %v84, 0
      %vm88 = vcmask 261120
      %v90 = vsel %vm88, %v78, 0
      %v93 = vsel %vm88, %v79, 0
      %95 = vmatpush.msra.mxu0 0.0
      %96 = vmatpush.msra.mxu0 0.0
      %97 = vmatpush.msra.mxu0 0.0
      %98 = vmatpush.msra.mxu0 0.0
      %99 = vmatpush.msra.mxu0 0.0
      %100 = vmatpush.msra.mxu0 0.0
      %101 = vmatpush.msra.mxu0 0.0
      %102 = vmatpush.msra.mxu0 0.0
      %103 = vmatpush.msra.mxu0 0.0
      %104 = vmatpush.msra.mxu0 0.0
      %105 = vmatpush.msra.mxu0 0.0
      %106 = vmatpush.msra.mxu0 0.0
      %107 = vmatpush.msra.mxu0 %v83
      %108 = vmatpush.msra.mxu0 %v82
      %109 = vmatpush.msra.mxu0 %v81
      %110 = vmatpush.msra.mxu0 %v80
      %111 = vmatmul.f32.gmra.mxu0 %v90
      %v112 = vpop.f32.mrf.mxu0
      %v113 = vadd.f32 %v86, %v112
      %114 = vmatmul.f32.gmra.mxu0 %v93
      %v115 = vpop.f32.mrf.mxu0
      %v116 = vadd.f32 %v86, %v115
      %117 = vdwg.mxu0
      %v118 = vmul.f32 %v113, 0.5
      %v119 = vmul.f32 %v116, 0.5
      %v120 = vmul.f32 %v113, 0.70710677
      %v121 = vmul.f32 %v116, 0.70710677
      %v122 = vmul.f32 %v120, %v120
      %v123 = vmin.f32 16.0, %v122
      %v124 = vmul.f32 %v123, 2.1237322e-06
      %v125 = vadd.f32 %v124, 0.00028619796
      %v126 = vmul.f32 %v123, %v125
      %v127 = vadd.f32 %v126, 0.0036580483
      %v128 = vmul.f32 %v123, %v127
      %v129 = vadd.f32 %v128, 0.05243302
      %v130 = vmul.f32 %v123, %v129
      %v131 = vadd.f32 %v130, 0.18741608
      %v132 = vmul.f32 %v123, %v131
      %v133 = vadd.f32 %v132, 1.1283791
      %v134 = vmul.f32 %v120, %v133
      %v135 = vmul.f32 %v123, 3.8918573e-05
      %v136 = vadd.f32 %v135, 0.001143296
      %v137 = vmul.f32 %v123, %v136
      %v138 = vadd.f32 %v137, 0.014752088
      %v139 = vmul.f32 %v123, %v138
      %v140 = vadd.f32 %v139, 0.112945676
      %v141 = vmul.f32 %v123, %v140
      %v142 = vadd.f32 %v141, 0.4994258
      %v143 = vmul.f32 %v123, %v142
      %v144 = vadd.f32 %v143, 1.0
      %v145 = vrcp.pop %v144
      %v146 = vmul.f32 %v144, %v145
      %v147 = vsub.f32 1.0, %v146
      %v148 = vmul.f32 %v145, %v147
      %v149 = vadd.f32 %v145, %v148
      %vm150 = vweird.f32 %v144
      %vm151 = vweird.f32 %v145
      %vm152 = vmor %vm150, %vm151
      %v153 = vsel %vm152, %v145, %v149
      %v154 = vand.u32 2147483647, %v144
      %vm155 = vcmp.eq.f32.partialorder %v154, 8.507059e+37
      %v156 = vand.u32 %v144, 2147483648
      %v157 = vor.u32 1.1754944e-38, %v156
      %v158 = vsel %vm155, %v157, %v153
      %v159 = vmul.f32 %v134, %v158
      %v160 = vmin.f32 %v159, 1.0
      %v161 = vmax.f32 %v160, -1.0
      %v162 = vmul.f32 %v121, %v121
      %v163 = vmin.f32 16.0, %v162
      %v164 = vmul.f32 %v163, 2.1237322e-06
      %v165 = vadd.f32 %v164, 0.00028619796
      %v166 = vmul.f32 %v163, %v165
      %v167 = vadd.f32 %v166, 0.0036580483
      %v168 = vmul.f32 %v163, %v167
      %v169 = vadd.f32 %v168, 0.05243302
      %v170 = vmul.f32 %v163, %v169
      %v171 = vadd.f32 %v170, 0.18741608
      %v172 = vmul.f32 %v163, %v171
      %v173 = vadd.f32 %v172, 1.1283791
      %v174 = vmul.f32 %v121, %v173
      %v175 = vmul.f32 %v163, 3.8918573e-05
      %v176 = vadd.f32 %v175, 0.001143296
      %v177 = vmul.f32 %v163, %v176
      %v178 = vadd.f32 %v177, 0.014752088
      %v179 = vmul.f32 %v163, %v178
      %v180 = vadd.f32 %v179, 0.112945676
      %v181 = vmul.f32 %v163, %v180
      %v182 = vadd.f32 %v181, 0.4994258
      %v183 = vmul.f32 %v163, %v182
      %v184 = vadd.f32 %v183, 1.0
      %v185 = vrcp.pop %v184
      %v186 = vmul.f32 %v184, %v185
      %v187 = vsub.f32 1.0, %v186
      %v188 = vmul.f32 %v185, %v187
      %v189 = vadd.f32 %v185, %v188
      %vm190 = vweird.f32 %v184
      %vm191 = vweird.f32 %v185
      %vm192 = vmor %vm190, %vm191
      %v193 = vsel %vm192, %v185, %v189
      %v194 = vand.u32 2147483647, %v184
      %vm195 = vcmp.eq.f32.partialorder %v194, 8.507059e+37
      %v196 = vand.u32 %v184, 2147483648
      %v197 = vor.u32 1.1754944e-38, %v196
      %v198 = vsel %vm195, %v197, %v193
      %v199 = vmul.f32 %v174, %v198
      %v200 = vmin.f32 %v199, 1.0
      %v201 = vmax.f32 %v200, -1.0
      %v202 = vadd.f32 %v161, 1.0
      %v203 = vadd.f32 %v201, 1.0
      %v204 = vmul.f32 %v118, %v202
      %v205 = vmul.f32 %v119, %v203
      %v206 = vsel %vm88, %v204, 0.0
      %207 = vadd.xlane.f32.xlu0 %v206
      %v208 = vpop.xlane.xlu0 %207
      %v209 = vsel %vm88, %v205, 0.0
      %210 = vadd.xlane.f32.xlu0 %v209
      %v211 = vpop.xlane.xlu0 %210
      %v212 = vmul.f32 %v208, 0.03125
      %v213 = vmul.f32 %v211, 0.03125
      %v214 = vmul.f32 %v204, %v204
      %v215 = vmul.f32 %v205, %v205
      %v216 = vsel %vm88, %v214, 0.0
      %217 = vadd.xlane.f32.xlu0 %v216
      %v218 = vpop.xlane.xlu0 %217
      %v219 = vsel %vm88, %v215, 0.0
      %220 = vadd.xlane.f32.xlu0 %v219
      %v221 = vpop.xlane.xlu0 %220
      %v222 = vmul.f32 %v218, 0.03125
      %v223 = vmul.f32 %v221, 0.03125
      %v224 = vmul.f32 %v212, %v212
      %v225 = vmul.f32 %v213, %v213
      %v226 = vsub.f32 %v222, %v224
      %v227 = vsub.f32 %v223, %v225
      %v228 = vmax.f32 %v226, 0.0
      %v229 = vmax.f32 %v227, 0.0
      %v230 = vsub.f32 %v204, %v212
      %v231 = vsub.f32 %v205, %v213
      %v232 = vadd.f32 %v228, 1e-12
      %v233 = vadd.f32 %v229, 1e-12
      %v234 = vrsqrt.pop %v232
      %v235 = vmul.f32 %v234, %v232
      %v236 = vmul.f32 %v235, %v234
      %v237 = vmul.f32 0.5, %v236
      %v238 = vsub.f32 1.5, %v237
      %v239 = vmul.f32 %v234, %v238
      %vm240 = vweird.f32 %v232
      %vm241 = vweird.f32 %v234
      %vm242 = vmor %vm240, %vm241
      %v243 = vsel %vm242, %v234, %v239
      %v244 = vrsqrt.pop %v233
      %v245 = vmul.f32 %v244, %v233
      %v246 = vmul.f32 %v245, %v244
      %v247 = vmul.f32 0.5, %v246
      %v248 = vsub.f32 1.5, %v247
      %v249 = vmul.f32 %v244, %v248
      %vm250 = vweird.f32 %v233
      %vm251 = vweird.f32 %v244
      %vm252 = vmor %vm250, %vm251
      %v253 = vsel %vm252, %v244, %v249
      %v254 = vmul.f32 %v230, %v243
      %v255 = vmul.f32 %v231, %v253
      %v256 = vld [vmem:[%s3] sm:$0x1]
      %v258 = vperm.slane %v256, 0
      %v260 = vmul.f32 %v254, %v258
      %v261 = vmul.f32 %v255, %v258
      %v262 = vld [vmem:[%s4] sm:$0x1]
      %v264 = vperm.slane %v262, 0
      %v266 = vadd.f32 %v260, %v264
      %v267 = vadd.f32 %v261, %v264
      %268 = vst.msk [vmem:[#allocation2] sm:$0xff] %vm88, %v266
      %269 = vst.msk [vmem:[#allocation2 + $0x8] sm:$0xff] %vm88, %v267
    $region45: #{tpu_custom_call.1} parent=1 // pred_fallthru
      _
    %v270 = vld [vmem:[#allocation2] sm:$0xff]
    %v271 = vld [vmem:[#allocation2 + $0x8] sm:$0xff]
    %v272 = vld [vmem:[#allocation8] sm:$0xff]
    %v273 = vld [vmem:[#allocation8 + $0x8] sm:$0xff]
    %v274 = vld [vmem:[#allocation8 + $0x10] sm:$0xff]
    %v275 = vld [vmem:[#allocation8 + $0x18] sm:$0xff]
    %v276 = vld [vmem:[%s6] sm:$0x1]
    %v278 = vperm.slane %v276, 0
    %vm280 = vcmask 261120
    %v282 = vsel %vm280, %v270, 0
    %v285 = vsel %vm280, %v271, 0
    %287 = vmatpush.msra.mxu0 0.0
    %288 = vmatpush.msra.mxu0 0.0
    %289 = vmatpush.msra.mxu0 0.0
    %290 = vmatpush.msra.mxu0 0.0
    %291 = vmatpush.msra.mxu0 0.0
    %292 = vmatpush.msra.mxu0 0.0
    %293 = vmatpush.msra.mxu0 0.0
    %294 = vmatpush.msra.mxu0 0.0
    %295 = vmatpush.msra.mxu0 0.0
    %296 = vmatpush.msra.mxu0 0.0
    %297 = vmatpush.msra.mxu0 0.0
    %298 = vmatpush.msra.mxu0 0.0
    %299 = vmatpush.msra.mxu0 %v275
    %300 = vmatpush.msra.mxu0 %v274
    %301 = vmatpush.msra.mxu0 %v273
    %302 = vmatpush.msra.mxu0 %v272
    %303 = vmatmul.f32.gmra.mxu0 %v282
    %v304 = vpop.f32.mrf.mxu0
    %v305 = vadd.f32 %v278, %v304
    %306 = vmatmul.f32.gmra.mxu0 %v285
    %v307 = vpop.f32.mrf.mxu0
    %v308 = vadd.f32 %v278, %v307
    %309 = vdwg.mxu0
    %310 = vst [vmem:[#allocation9] sm:$0xff] %v305
    %311 = vst [vmem:[#allocation9 + $0x8] sm:$0xff] %v308
    // Predicated region
    $region46: #{tpu_custom_call.1} parent=1 // pred_check
      _
    $region47: #{tpu_custom_call.1} parent=1 // pred_check_branch
      %313 = sbr.rel (0) target = $region49
    $region48: #{tpu_custom_call.1} parent=1 // pred_region
      %315 = vsyncadd [#allocation5], 0
      %s316 = sshll.u32 [#allocation9], 4
      %s317 = int_to_ptr.vmem [resolvable:$true] %s316
      %s318 = sshll.u32 %s7, 4
      %s319 = int_to_ptr.hbm [resolvable:$true] %s318
      %324 = dma.vmem_to_hbm [thread:$0]  %s317, 256, %s319, [#allocation5], 128, 128, 8
    $region49: #{tpu_custom_call.1} parent=1 // pred_fallthru
      _
    // Predicated region
    $region50: #{tpu_custom_call.1} parent=1 // pred_check
      _
    $region51: #{tpu_custom_call.1} parent=1 // pred_check_branch
      %326 = sbr.rel (0) target = $region53
    $region52: #{tpu_custom_call.1} parent=1 // pred_region
      %328 = dma.done [#allocation5], 256
    $region53: #{tpu_custom_call.1} parent=1 // pred_fallthru
      _
    %329 = vsyncpa [#allocation4], 1
    %330 = vsyncpa [#allocation7], 1
    %331 = vsyncpa [#allocation5], 1

</llo_original>
